<compile_context>
chip_gen: v7x
topology: tpu7x:2x2x1
jax: 0.10.0
libtpu: 0.0.40
codegen_flags: <defaults>
</compile_context>

<pallas_src>
import functools

import jax
import jax.numpy as jnp
from jax.experimental import pallas as pl
from jax.experimental.pallas import tpu as pltpu

LANE = 128  # TPU lane width; feature dims and node counts are padded to this.


def _vmem_spec():
    return pl.BlockSpec(memory_space=pltpu.MemorySpace.VMEM)


def _round_up(n, m):
    return ((n + m - 1) // m) * m


def _pad2(x, rows, cols):
    return jnp.pad(x, ((0, rows - x.shape[0]), (0, cols - x.shape[1])))


def _bf16(x):
    return x.astype(jnp.bfloat16)


# ----------------------------- fused Pallas kernel ----------------------------

def _gnn_layers(x_rt, x_ot, a_gcn, a_mean, w_gcnr_ref, b_gcn_ref, w_l_ref,
                b_l_ref, num_layers, hid_pad):
    """Statically unrolled HeteroConv stack.  All MXU inputs are bf16; f32 accumulate.

    Per layer (4 MXU passes):
      proj  = x_rt @ [w_gcn | w_r]          (N = 2*hid_pad -> fills 256-wide MXU)
      ot    = relu(a_gcn @ proj[:, :hid] + b_gcn)
      neigh = a_mean @ x_ot
      rt    = relu(neigh @ w_l + b_l + proj[:, hid:])
    Activations are carried in bf16 (one cast per produced tensor).
    """
    for l in range(num_layers):  # num_layers is a Python int (static unroll)
        proj = jnp.dot(x_rt, w_gcnr_ref[l], preferred_element_type=jnp.float32)
        h = _bf16(proj[:, :hid_pad])          # lane-aligned split (128-lane boundary)
        root = proj[:, hid_pad:]

        # GCNConv: retweet -> original_tweet
        ot = jnp.dot(a_gcn, h, preferred_element_type=jnp.float32) + b_gcn_ref[l]
        ot = jnp.maximum(ot, 0.0)

        # SAGEConv (mean aggregation + root weight): original_tweet -> retweet
        neigh = jnp.dot(a_mean, x_ot, preferred_element_type=jnp.float32)
        rt = (jnp.dot(_bf16(neigh), w_l_ref[l], preferred_element_type=jnp.float32)
              + b_l_ref[l] + root)
        rt = jnp.maximum(rt, 0.0)

        x_ot = _bf16(ot)
        x_rt = _bf16(rt)
    return x_ot, x_rt


def fused_gnn_kernel(x_rt_ref, x_ot_ref, x_au_ref, a_gcn_ref, a_mean_ref,
                     w_gcnr_ref, b_gcn_ref, w_l_ref, b_l_ref,
                     lin_w_ref, lin_b_ref, out_ref, *, num_layers, hid_pad):
    """All HeteroConv layers + final Linear fused; no activation writebacks."""
    x_ot, x_rt = _gnn_layers(x_rt_ref[...], x_ot_ref[...], a_gcn_ref[...],
                             a_mean_ref[...], w_gcnr_ref, b_gcn_ref, w_l_ref,
                             b_l_ref, num_layers, hid_pad)
    del x_ot, x_rt
    out_ref[...] = (jnp.dot(x_au_ref[...], lin_w_ref[...],
                            preferred_element_type=jnp.float32) + lin_b_ref[...])


def fused_gnn_kernel_with_acts(x_rt_ref, x_ot_ref, x_au_ref, a_gcn_ref, a_mean_ref,
                               w_gcnr_ref, b_gcn_ref, w_l_ref, b_l_ref,
                               lin_w_ref, lin_b_ref,
                               out_ref, ot_out_ref, rt_out_ref, *,
                               num_layers, hid_pad):
    """Same as above but also writes the final ot/rt activations (f32)."""
    x_ot, x_rt = _gnn_layers(x_rt_ref[...], x_ot_ref[...], a_gcn_ref[...],
                             a_mean_ref[...], w_gcnr_ref, b_gcn_ref, w_l_ref,
                             b_l_ref, num_layers, hid_pad)
    out_ref[...] = (jnp.dot(x_au_ref[...], lin_w_ref[...],
                            preferred_element_type=jnp.float32) + lin_b_ref[...])
    ot_out_ref[...] = x_ot.astype(jnp.float32)
    rt_out_ref[...] = x_rt.astype(jnp.float32)


# ----------------------------- JAX glue (graph -> dense operators) ------------

def build_gcn_operator(edge_index, n_src, n_dst, n_src_pad, n_dst_pad):
    """Dense [n_dst_pad, n_src_pad] GCN operator, symmetric norm, no self loops."""
    src, dst = edge_index[0], edge_index[1]
    ones = jnp.ones(src.shape[0], jnp.float32)
    deg_src = jnp.zeros((n_src,), jnp.float32).at[src].add(ones)
    deg_dst = jnp.zeros((n_dst,), jnp.float32).at[dst].add(ones)
    inv_s = jnp.where(deg_src > 0, jax.lax.rsqrt(jnp.maximum(deg_src, 1.0)), 0.0)
    inv_d = jnp.where(deg_dst > 0, jax.lax.rsqrt(jnp.maximum(deg_dst, 1.0)), 0.0)
    norm = inv_s[src] * inv_d[dst]
    return jnp.zeros((n_dst_pad, n_src_pad), jnp.float32).at[dst, src].add(norm)


def build_mean_operator(edge_index, n_src, n_dst, n_src_pad, n_dst_pad):
    """Dense [n_dst_pad, n_src_pad] mean-aggregation operator (SAGE neighbor mean)."""
    del n_src, n_dst
    src, dst = edge_index[0], edge_index[1]
    adj = jnp.zeros((n_dst_pad, n_src_pad), jnp.float32).at[dst, src].add(1.0)
    deg = adj.sum(axis=1, keepdims=True)
    return jnp.where(deg > 0, adj / jnp.maximum(deg, 1.0), 0.0)


# ----------------------------- VMEM budgeting ---------------------------------

def _vmem_limit_bytes(n_rt_p, n_ot_p, n_au_p, fp, num_layers, emit_acts):
    """Footprint-derived scoped-VMEM limit, clamped to the chip's physical capacity."""
    bf16, f32 = 2, 4
    operators = 2 * n_rt_p * n_ot_p * bf16                       # a_gcn + a_mean
    acts_in = (n_rt_p + n_ot_p + n_au_p) * fp * bf16
    weights = num_layers * (fp * 2 * fp + fp * fp) * bf16        # [w_gcn|w_r] + w_l
    biases = num_layers * 2 * fp * f32
    lin = fp * fp * bf16 + fp * f32
    outs = n_au_p * fp * f32
    if emit_acts:
        outs += (n_rt_p + n_ot_p) * fp * f32
    temps = (3 * n_rt_p + n_ot_p) * fp * f32                     # proj/neigh/rt + ot
    footprint = operators + acts_in + weights + biases + lin + outs + temps

    want = 2 * footprint + 8 * 1024 * 1024                       # 2x slack + margin
    try:
        cap = int(0.85 * pltpu.get_tpu_info().vmem_capacity_bytes)
    except Exception:
        cap = 56 * 1024 * 1024   # safe on v7x (64 MiB physical); conservative elsewhere
    return min(max(want, 32 * 1024 * 1024), cap)


# ----------------------------- top-level forward -------------------------------

def geo_cov19_hetero_gnn(x_dict, edge_index_dict, params, return_activations=False):
    n_rt = x_dict['retweet'].shape[0]
    n_ot = x_dict['original_tweet'].shape[0]
    n_au = x_dict['author'].shape[0]
    num_layers = len(params['convs'])
    hidden = params['convs'][0]['w_gcn'].shape[1]
    out_channels = params['lin_w'].shape[1]

    # Common padded feature width (covers every in/out feature dim) and padded node
    # counts -> lane/sublane-dense operators, activations and output slabs; zero
    # padding is mathematically inert (see header note on padded rows vs columns).
    fp = _round_up(max(x_dict['retweet'].shape[1], x_dict['original_tweet'].shape[1],
                       x_dict['author'].shape[1], hidden, out_channels), LANE)
    n_rt_p = _round_up(n_rt, LANE)
    n_ot_p = _round_up(n_ot, LANE)
    n_au_p = _round_up(n_au, LANE)

    a_gcn = build_gcn_operator(
        edge_index_dict[('retweet', 'of', 'original_tweet')], n_rt, n_ot, n_rt_p, n_ot_p)
    a_mean = build_mean_operator(
        edge_index_dict[('original_tweet', 'rev_of', 'retweet')], n_ot, n_rt, n_ot_p, n_rt_p)

    # Inputs / operators / weights pre-cast to bf16 in HBM (biases stay f32).
    x_rt_p = _bf16(_pad2(x_dict['retweet'], n_rt_p, fp))
    x_ot_p = _bf16(_pad2(x_dict['original_tweet'], n_ot_p, fp))
    x_au_p = _bf16(_pad2(x_dict['author'], n_au_p, fp))

    w_gcnr_s = _bf16(jnp.stack([                                  # [L, fp, 2*fp]
        jnp.concatenate([_pad2(lp['w_gcn'], fp, fp), _pad2(lp['w_r'], fp, fp)], axis=1)
        for lp in params['convs']]))
    w_l_s = _bf16(jnp.stack([_pad2(lp['w_l'], fp, fp) for lp in params['convs']]))
    b_gcn_s = jnp.stack([_pad2(lp['b_gcn'], 1, fp) for lp in params['convs']])
    b_l_s = jnp.stack([_pad2(lp['b_l'], 1, fp) for lp in params['convs']])
    lin_w_p = _bf16(_pad2(params['lin_w'], fp, fp))
    lin_b_p = _pad2(params['lin_b'], 1, fp)

    out_shapes = [jax.ShapeDtypeStruct((n_au_p, fp), jnp.float32)]
    kernel = fused_gnn_kernel
    if return_activations:
        kernel = fused_gnn_kernel_with_acts
        out_shapes += [jax.ShapeDtypeStruct((n_ot_p, fp), jnp.float32),
                       jax.ShapeDtypeStruct((n_rt_p, fp), jnp.float32)]

    vlim = _vmem_limit_bytes(n_rt_p, n_ot_p, n_au_p, fp, num_layers, return_activations)

    results = pl.pallas_call(
        functools.partial(kernel, num_layers=num_layers, hid_pad=fp),
        out_shape=tuple(out_shapes),
        in_specs=[_vmem_spec()] * 11,
        out_specs=tuple([_vmem_spec()] * len(out_shapes)),
        compiler_params=pltpu.CompilerParams(vmem_limit_bytes=vlim),
    )(x_rt_p, x_ot_p, x_au_p, _bf16(a_gcn), _bf16(a_mean),
      w_gcnr_s, b_gcn_s, w_l_s, b_l_s, lin_w_p, lin_b_p)

    out = results[0][:n_au, :out_channels]
    if return_activations:
        return out, results[1][:n_ot, :hidden], results[2][:n_rt, :hidden]
    return out


# ----------------------------- pure-JAX f32 reference --------------------------

def reference_forward(x_dict, a_gcn, a_mean, params):
    x_rt = x_dict['retweet']
    x_ot = x_dict['original_tweet']
    for lp in params['convs']:
        ot = jnp.maximum(a_gcn @ (x_rt @ lp['w_gcn']) + lp['b_gcn'], 0.0)
        rt = jnp.maximum((a_mean @ x_ot) @ lp['w_l'] + lp['b_l'] + x_rt @ lp['w_r'], 0.0)
        x_ot, x_rt = ot, rt
    out = x_dict['author'] @ params['lin_w'] + params['lin_b']
    return out, x_ot, x_rt


# ----------------------------- deterministic setup & run -----------------------

def _glorot(k, shape):
    fan_in, fan_out = shape
    lim = jnp.sqrt(6.0 / (fan_in + fan_out))
    return jax.random.uniform(k, shape, jnp.float32, -lim, lim)


if __name__ == "__main__":
    key = jax.random.PRNGKey(0)
    hidden_channels, out_channels, num_layers = 32, 8, 2
    n_author, n_rt, n_ot = 4, 16, 8
    f_rt, f_ot, f_author = 16, 24, hidden_channels   # author feat == hidden for final lin
    n_edges = 24

    ks = jax.random.split(key, 16)

    x_dict = {
        'author': jax.random.normal(ks[0], (n_author, f_author), jnp.float32),
        'retweet': jax.random.normal(ks[1], (n_rt, f_rt), jnp.float32),
        'original_tweet': jax.random.normal(ks[2], (n_ot, f_ot), jnp.float32),
    }
    src = jax.random.randint(ks[3], (n_edges,), 0, n_rt)
    dst = jax.random.randint(ks[4], (n_edges,), 0, n_ot)
    edge_index_dict = {
        ('retweet', 'of', 'original_tweet'): jnp.stack([src, dst]),
        ('original_tweet', 'rev_of', 'retweet'): jnp.stack([dst, src]),
    }

    convs = []
    in_rt, in_ot = f_rt, f_ot
    ki = 5
    for _ in range(num_layers):
        convs.append({
            'w_gcn': _glorot(ks[ki], (in_rt, hidden_channels)),
            'b_gcn': jnp.zeros((1, hidden_channels), jnp.float32),
            'w_l': _glorot(ks[ki + 1], (in_ot, hidden_channels)),
            'b_l': jnp.zeros((1, hidden_channels), jnp.float32),
            'w_r': _glorot(ks[ki + 2], (in_rt, hidden_channels)),
        })
        ki += 3
        in_rt, in_ot = hidden_channels, hidden_channels

    params = {
        'convs': convs,
        'lin_w': _glorot(ks[ki], (f_author, out_channels)),
        'lin_b': jnp.zeros((1, out_channels), jnp.float32),
    }

    # Path used by most callers (no activation writebacks).
    out_fast = geo_cov19_hetero_gnn(x_dict, edge_index_dict, params)
    out_fast = jax.block_until_ready(out_fast)

    # Path with activation outputs (for validation against the f32 reference).
    out, ot_act, rt_act = geo_cov19_hetero_gnn(
        x_dict, edge_index_dict, params, return_activations=True)
    out, ot_act, rt_act = jax.block_until_ready((out, ot_act, rt_act))

    # f32 reference (unpadded dense operators) to validate the bf16 kernel path.
    a_gcn_ref = build_gcn_operator(
        edge_index_dict[('retweet', 'of', 'original_tweet')], n_rt, n_ot, n_rt, n_ot)
    a_mean_ref = build_mean_operator(
        edge_index_dict[('original_tweet', 'rev_of', 'retweet')], n_ot, n_rt, n_ot, n_rt)
    ref_out, ref_ot, ref_rt = reference_forward(x_dict, a_gcn_ref, a_mean_ref, params)

    assert out.shape == (n_author, out_channels)
    assert jnp.all(jnp.isfinite(out))
    assert jnp.allclose(out_fast, out, rtol=1e-6, atol=1e-6)
    assert jnp.allclose(out, ref_out, rtol=5e-2, atol=5e-2)
    assert jnp.allclose(ot_act, ref_ot, rtol=5e-2, atol=5e-2)
    assert jnp.allclose(rt_act, ref_rt, rtol=5e-2, atol=5e-2)
    print("KERNEL_OK")
</pallas_src>

<mosaic_0001>
module attributes {stable_mosaic.version = 11 : i64} {
  func.func @fused_gnn_kernel(%arg0: memref<128x128xbf16, #tpu.memory_space<vmem>>, %arg1: memref<128x128xbf16, #tpu.memory_space<vmem>>, %arg2: memref<128x128xbf16, #tpu.memory_space<vmem>>, %arg3: memref<128x128xbf16, #tpu.memory_space<vmem>>, %arg4: memref<128x128xbf16, #tpu.memory_space<vmem>>, %arg5: memref<2x128x256xbf16, #tpu.memory_space<vmem>>, %arg6: memref<2x1x128xf32, #tpu.memory_space<vmem>>, %arg7: memref<2x128x128xbf16, #tpu.memory_space<vmem>>, %arg8: memref<2x1x128xf32, #tpu.memory_space<vmem>>, %arg9: memref<128x128xbf16, #tpu.memory_space<vmem>>, %arg10: memref<1x128xf32, #tpu.memory_space<vmem>>, %arg11: memref<128x128xf32, #tpu.memory_space<vmem>>) attributes {dimension_semantics = [], scalar_prefetch = 0 : i64, scratch_operands = 0 : i64, tpu.core_type = #tpu.core_type<tc>} {
    %c0 = arith.constant 0 : index
    %c0_0 = arith.constant 0 : index
    %0 = vector.load %arg2[%c0, %c0_0] : memref<128x128xbf16, #tpu.memory_space<vmem>>, vector<128x128xbf16>
    %c0_1 = arith.constant 0 : index
    %c0_2 = arith.constant 0 : index
    %1 = vector.load %arg9[%c0_1, %c0_2] : memref<128x128xbf16, #tpu.memory_space<vmem>>, vector<128x128xbf16>
    %cst = arith.constant dense<0.000000e+00> : vector<128x128xf32>
    %2 = tpu.matmul %0, %1, %cst {dimension_numbers = #tpu.dot_dimension_numbers<[1], [0], [0], [1], [0, 0, 1, 1], [], []>} : vector<128x128xbf16>, vector<128x128xbf16>, vector<128x128xf32> -> vector<128x128xf32>
    %c0_3 = arith.constant 0 : index
    %c0_4 = arith.constant 0 : index
    %3 = vector.load %arg10[%c0_3, %c0_4] : memref<1x128xf32, #tpu.memory_space<vmem>>, vector<1x128xf32>
    %4 = vector.broadcast %3 : vector<1x128xf32> to vector<128x128xf32>
    %5 = arith.addf %2, %4 : vector<128x128xf32>
    %c0_5 = arith.constant 0 : index
    %c0_6 = arith.constant 0 : index
    %6 = vector.load %arg11[%c0_5, %c0_6] : memref<128x128xf32, #tpu.memory_space<vmem>>, vector<128x128xf32>
    tpu.vector_store %arg11[%c0_5, %c0_6], %5 {strides = array<i32>} : memref<128x128xf32, #tpu.memory_space<vmem>>, vector<128x128xf32>,
    return
  }
}

</mosaic_0001>

<llo_original>
// kernel: tpu_custom_call.1
$region0: #{tpu_custom_call.1}
  #allocation0 [shape = 'u32[]', space=smem, size = 0x4, offset = 0x4, fixed_abs, tag = 'smem constant byte address 0x4 - core index']
  #allocation1 [shape = 'u32[144,128]{1,0:T(1,128)}', space=vmem, size = 0x12000, scoped, tag = 'internal scratch']
  %s0 = inlined_call_operand.hbm [shape: bf16[128,128], index: 0, kind: input, shape index: {}]
  %s1 = inlined_call_operand.hbm [shape: bf16[128,128], index: 1, kind: input, shape index: {}]
  %s2 = inlined_call_operand.hbm [shape: bf16[128,128], index: 2, kind: input, shape index: {}]
  %s3 = inlined_call_operand.hbm [shape: bf16[128,128], index: 3, kind: input, shape index: {}]
  %s4 = inlined_call_operand.hbm [shape: bf16[128,128], index: 4, kind: input, shape index: {}]
  %s5 = inlined_call_operand.hbm [shape: bf16[2,128,256], index: 5, kind: input, shape index: {}]
  %s6 = inlined_call_operand.vmem [shape: f32[2,1,128], index: 6, kind: input, shape index: {}]
  %s7 = inlined_call_operand.hbm [shape: bf16[2,128,128], index: 7, kind: input, shape index: {}]
  %s8 = inlined_call_operand.vmem [shape: f32[2,1,128], index: 8, kind: input, shape index: {}]
  %s9 = inlined_call_operand.hbm [shape: bf16[128,128], index: 9, kind: input, shape index: {}]
  %s10 = inlined_call_operand.vmem [shape: f32[1,128], index: 10, kind: input, shape index: {}]
  %s11 = inlined_call_operand.hbm [shape: f32[128,128], index: 11, kind: output, shape index: {}]
  %s12 = sld [smem:[#allocation0]]
  $region86: #{tpu_custom_call.1} parent=0
    _
  %s14 = ssub.s32 1, %s12
  %s15 = scalar_select 0, %s14, %s12
  $region1: #{tpu_custom_call.1} parent=0
    #allocation2 [shape = 'u8[32768]{0}', space=vmem, size = 0x8000, scoped, tag = 'input window, operand 0, single buffered']
    #allocation3 [shape = 's32[1]{0}', space=sflag, size = 0x4, scoped, tag = 'scoped memory for tpu_custom_call.1']
    #allocation4 [shape = 's32[1]{0}', space=sflag, size = 0x4, scoped, tag = 'scoped memory for tpu_custom_call.1']
    #allocation5 [shape = 'u8[32768]{0}', space=vmem, size = 0x8000, scoped, tag = 'input window, operand 1, single buffered']
    #allocation6 [shape = 's32[1]{0}', space=sflag, size = 0x4, scoped, tag = 'scoped memory for tpu_custom_call.1']
    #allocation7 [shape = 'u8[32768]{0}', space=vmem, size = 0x8000, scoped, tag = 'input window, operand 2, single buffered']
    #allocation8 [shape = 'u8[32768]{0}', space=vmem, size = 0x8000, scoped, tag = 'input window, operand 3, single buffered']
    #allocation9 [shape = 's32[1]{0}', space=sflag, size = 0x4, scoped, tag = 'scoped memory for tpu_custom_call.1']
    #allocation10 [shape = 'u8[32768]{0}', space=vmem, size = 0x8000, scoped, tag = 'input window, operand 4, single buffered']
    #allocation11 [shape = 'u8[131072]{0}', space=vmem, size = 0x20000, scoped, tag = 'input window, operand 5, single buffered']
    #allocation12 [shape = 's32[1]{0}', space=sflag, size = 0x4, scoped, tag = 'scoped memory for tpu_custom_call.1']
    #allocation13 [shape = 'u8[65536]{0}', space=vmem, size = 0x10000, scoped, tag = 'input window, operand 7, single buffered']
    #allocation14 [shape = 'u8[32768]{0}', space=vmem, size = 0x8000, scoped, tag = 'input window, operand 9, single buffered']
    #allocation15 [shape = 's32[1]{0}', space=sflag, size = 0x4, scoped, tag = 'scoped memory for tpu_custom_call.1']
    #allocation16 [shape = 'u8[65536]{0}', space=vmem, size = 0x10000, scoped, tag = 'output window, operand 0, single buffered']
    %16 = vsyncpa [#allocation3], 0
    %17 = vsyncpa [#allocation6], 0
    %18 = vsyncpa [#allocation9], 0
    %19 = vsyncpa [#allocation12], 0
    %20 = vsyncpa [#allocation15], 0
    %21 = vsyncpa [#allocation4], 0
    // Predicated region
    $region2: #{tpu_custom_call.1} parent=1 // pred_check
      _
    $region3: #{tpu_custom_call.1} parent=1 // pred_check_branch
      %23 = sbr.rel (0) target = $region5
    $region4: #{tpu_custom_call.1} parent=1 // pred_region
      %s25 = ssub.s32 1024, 1024
      %26 = vsyncadd [#allocation3], %s25
      %s27 = sshll.u32 [#allocation2], 4
      %s28 = int_to_ptr.vmem [resolvable:$true] %s27
      %33 = dma.hbm_to_vmem [thread:$0]  %s0, 1024, %s28, [#allocation3], 64, 64, 4
    $region5: #{tpu_custom_call.1} parent=1 // pred_fallthru
      _
    // Predicated region
    $region6: #{tpu_custom_call.1} parent=1 // pred_check
      _
    $region7: #{tpu_custom_call.1} parent=1 // pred_check_branch
      %35 = sbr.rel (0) target = $region9
    $region8: #{tpu_custom_call.1} parent=1 // pred_region
      %s37 = ssub.s32 1024, 1024
      %38 = vsyncadd [#allocation6], %s37
      %s39 = sshll.u32 [#allocation5], 4
      %s40 = int_to_ptr.vmem [resolvable:$true] %s39
      %45 = dma.hbm_to_vmem [thread:$0]  %s1, 1024, %s40, [#allocation6], 64, 64, 4
    $region9: #{tpu_custom_call.1} parent=1 // pred_fallthru
      _
    // Predicated region
    $region10: #{tpu_custom_call.1} parent=1 // pred_check
      _
    $region11: #{tpu_custom_call.1} parent=1 // pred_check_branch
      %47 = sbr.rel (0) target = $region13
    $region12: #{tpu_custom_call.1} parent=1 // pred_region
      %s49 = ssub.s32 1024, 1024
      %50 = vsyncadd [#allocation6], %s49
      %s51 = sshll.u32 [#allocation7], 4
      %s52 = int_to_ptr.vmem [resolvable:$true] %s51
      %57 = dma.hbm_to_vmem [thread:$0]  %s2, 1024, %s52, [#allocation6], 64, 64, 4
    $region13: #{tpu_custom_call.1} parent=1 // pred_fallthru
      _
    // Predicated region
    $region14: #{tpu_custom_call.1} parent=1 // pred_check
      _
    $region15: #{tpu_custom_call.1} parent=1 // pred_check_branch
      %59 = sbr.rel (0) target = $region17
    $region16: #{tpu_custom_call.1} parent=1 // pred_region
      %s61 = ssub.s32 1024, 1024
      %62 = vsyncadd [#allocation9], %s61
      %s63 = sshll.u32 [#allocation8], 4
      %s64 = int_to_ptr.vmem [resolvable:$true] %s63
      %69 = dma.hbm_to_vmem [thread:$0]  %s3, 1024, %s64, [#allocation9], 64, 64, 4
    $region17: #{tpu_custom_call.1} parent=1 // pred_fallthru
      _
    // Predicated region
    $region18: #{tpu_custom_call.1} parent=1 // pred_check
      _
    $region19: #{tpu_custom_call.1} parent=1 // pred_check_branch
      %71 = sbr.rel (0) target = $region21
    $region20: #{tpu_custom_call.1} parent=1 // pred_region
      %s73 = ssub.s32 1024, 1024
      %74 = vsyncadd [#allocation9], %s73
      %s75 = sshll.u32 [#allocation10], 4
      %s76 = int_to_ptr.vmem [resolvable:$true] %s75
      %81 = dma.hbm_to_vmem [thread:$0]  %s4, 1024, %s76, [#allocation9], 64, 64, 4
    $region21: #{tpu_custom_call.1} parent=1 // pred_fallthru
      _
    // Predicated region
    $region22: #{tpu_custom_call.1} parent=1 // pred_check
      _
    $region23: #{tpu_custom_call.1} parent=1 // pred_check_branch
      %83 = sbr.rel (0) target = $region25
    $region24: #{tpu_custom_call.1} parent=1 // pred_region
      %s85 = ssub.s32 4096, 4096
      %86 = vsyncadd [#allocation12], %s85
      %s87 = sshll.u32 [#allocation11], 4
      %s88 = int_to_ptr.vmem [resolvable:$true] %s87
      %93 = dma.hbm_to_vmem [thread:$0]  %s5, 4096, %s88, [#allocation12], 128, 128, 8
    $region25: #{tpu_custom_call.1} parent=1 // pred_fallthru
      _
    // Predicated region
    $region26: #{tpu_custom_call.1} parent=1 // pred_check
      _
    $region27: #{tpu_custom_call.1} parent=1 // pred_check_branch
      %95 = sbr.rel (0) target = $region29
    $region28: #{tpu_custom_call.1} parent=1 // pred_region
      _
    $region29: #{tpu_custom_call.1} parent=1 // pred_fallthru
      _
    // Predicated region
    $region30: #{tpu_custom_call.1} parent=1 // pred_check
      _
    $region31: #{tpu_custom_call.1} parent=1 // pred_check_branch
      %97 = sbr.rel (0) target = $region33
    $region32: #{tpu_custom_call.1} parent=1 // pred_region
      %s99 = ssub.s32 2048, 2048
      %100 = vsyncadd [#allocation12], %s99
      %s101 = sshll.u32 [#allocation13], 4
      %s102 = int_to_ptr.vmem [resolvable:$true] %s101
      %107 = dma.hbm_to_vmem [thread:$0]  %s7, 2048, %s102, [#allocation12], 64, 64, 4
    $region33: #{tpu_custom_call.1} parent=1 // pred_fallthru
      _
    // Predicated region
    $region34: #{tpu_custom_call.1} parent=1 // pred_check
      _
    $region35: #{tpu_custom_call.1} parent=1 // pred_check_branch
      %109 = sbr.rel (0) target = $region37
    $region36: #{tpu_custom_call.1} parent=1 // pred_region
      _
    $region37: #{tpu_custom_call.1} parent=1 // pred_fallthru
      _
    // Predicated region
    $region38: #{tpu_custom_call.1} parent=1 // pred_check
      _
    $region39: #{tpu_custom_call.1} parent=1 // pred_check_branch
      %111 = sbr.rel (0) target = $region41
    $region40: #{tpu_custom_call.1} parent=1 // pred_region
      %s113 = ssub.s32 1024, 1024
      %114 = vsyncadd [#allocation15], %s113
      %s115 = sshll.u32 [#allocation14], 4
      %s116 = int_to_ptr.vmem [resolvable:$true] %s115
      %121 = dma.hbm_to_vmem [thread:$0]  %s9, 1024, %s116, [#allocation15], 64, 64, 4
    $region41: #{tpu_custom_call.1} parent=1 // pred_fallthru
      _
    // Predicated region
    $region42: #{tpu_custom_call.1} parent=1 // pred_check
      _
    $region43: #{tpu_custom_call.1} parent=1 // pred_check_branch
      %123 = sbr.rel (0) target = $region45
    $region44: #{tpu_custom_call.1} parent=1 // pred_region
      _
    $region45: #{tpu_custom_call.1} parent=1 // pred_fallthru
      _
    // Predicated region
    $region46: #{tpu_custom_call.1} parent=1 // pred_check
      _
    $region47: #{tpu_custom_call.1} parent=1 // pred_check_branch
      %125 = sbr.rel (0) target = $region49
    $region48: #{tpu_custom_call.1} parent=1 // pred_region
      %126 = dma.done [#allocation3], 1024
    $region49: #{tpu_custom_call.1} parent=1 // pred_fallthru
      _
    // Predicated region
    $region50: #{tpu_custom_call.1} parent=1 // pred_check
      _
    $region51: #{tpu_custom_call.1} parent=1 // pred_check_branch
      %128 = sbr.rel (0) target = $region53
    $region52: #{tpu_custom_call.1} parent=1 // pred_region
      %129 = dma.done [#allocation6], 1024
    $region53: #{tpu_custom_call.1} parent=1 // pred_fallthru
      _
    // Predicated region
    $region54: #{tpu_custom_call.1} parent=1 // pred_check
      _
    $region55: #{tpu_custom_call.1} parent=1 // pred_check_branch
      %131 = sbr.rel (0) target = $region57
    $region56: #{tpu_custom_call.1} parent=1 // pred_region
      %132 = dma.done [#allocation6], 1024
    $region57: #{tpu_custom_call.1} parent=1 // pred_fallthru
      _
    // Predicated region
    $region58: #{tpu_custom_call.1} parent=1 // pred_check
      _
    $region59: #{tpu_custom_call.1} parent=1 // pred_check_branch
      %134 = sbr.rel (0) target = $region61
    $region60: #{tpu_custom_call.1} parent=1 // pred_region
      %135 = dma.done [#allocation9], 1024
    $region61: #{tpu_custom_call.1} parent=1 // pred_fallthru
      _
    // Predicated region
    $region62: #{tpu_custom_call.1} parent=1 // pred_check
      _
    $region63: #{tpu_custom_call.1} parent=1 // pred_check_branch
      %137 = sbr.rel (0) target = $region65
    $region64: #{tpu_custom_call.1} parent=1 // pred_region
      %138 = dma.done [#allocation9], 1024
    $region65: #{tpu_custom_call.1} parent=1 // pred_fallthru
      _
    // Predicated region
    $region66: #{tpu_custom_call.1} parent=1 // pred_check
      _
    $region67: #{tpu_custom_call.1} parent=1 // pred_check_branch
      %140 = sbr.rel (0) target = $region69
    $region68: #{tpu_custom_call.1} parent=1 // pred_region
      %141 = dma.done [#allocation12], 4096
    $region69: #{tpu_custom_call.1} parent=1 // pred_fallthru
      _
    // Predicated region
    $region70: #{tpu_custom_call.1} parent=1 // pred_check
      _
    $region71: #{tpu_custom_call.1} parent=1 // pred_check_branch
      %143 = sbr.rel (0) target = $region73
    $region72: #{tpu_custom_call.1} parent=1 // pred_region
      %144 = dma.done [#allocation12], 2048
    $region73: #{tpu_custom_call.1} parent=1 // pred_fallthru
      _
    // Predicated region
    $region74: #{tpu_custom_call.1} parent=1 // pred_check
      _
    $region75: #{tpu_custom_call.1} parent=1 // pred_check_branch
      %146 = sbr.rel (0) target = $region77
    $region76: #{tpu_custom_call.1} parent=1 // pred_region
      %147 = dma.done [#allocation15], 1024
    $region77: #{tpu_custom_call.1} parent=1 // pred_fallthru
      _
    %v149 = vld [vmem:[#allocation7] sm:$0xf]
    %v150 = vld [vmem:[#allocation7 + $0x4] sm:$0xf]
    %v151 = vld [vmem:[#allocation7 + $0x8] sm:$0xf]
    %v152 = vld [vmem:[#allocation7 + $0xc] sm:$0xf]
    %v153 = vld [vmem:[#allocation7 + $0x10] sm:$0xf]
    %v154 = vld [vmem:[#allocation7 + $0x14] sm:$0xf]
    %v155 = vld [vmem:[#allocation7 + $0x18] sm:$0xf]
    %v156 = vld [vmem:[#allocation7 + $0x1c] sm:$0xf]
    %v157 = vld [vmem:[#allocation7 + $0x20] sm:$0xf]
    %v158 = vld [vmem:[#allocation7 + $0x24] sm:$0xf]
    %v159 = vld [vmem:[#allocation7 + $0x28] sm:$0xf]
    %v160 = vld [vmem:[#allocation7 + $0x2c] sm:$0xf]
    %v161 = vld [vmem:[#allocation7 + $0x30] sm:$0xf]
    %v162 = vld [vmem:[#allocation7 + $0x34] sm:$0xf]
    %v163 = vld [vmem:[#allocation7 + $0x38] sm:$0xf]
    %v164 = vld [vmem:[#allocation7 + $0x3c] sm:$0xf]
    %v165 = vld [vmem:[#allocation14] sm:$0xf]
    %v166 = vld [vmem:[#allocation14 + $0x4] sm:$0xf]
    %v167 = vld [vmem:[#allocation14 + $0x8] sm:$0xf]
    %v168 = vld [vmem:[#allocation14 + $0xc] sm:$0xf]
    %v169 = vld [vmem:[#allocation14 + $0x10] sm:$0xf]
    %v170 = vld [vmem:[#allocation14 + $0x14] sm:$0xf]
    %v171 = vld [vmem:[#allocation14 + $0x18] sm:$0xf]
    %v172 = vld [vmem:[#allocation14 + $0x1c] sm:$0xf]
    %v173 = vld [vmem:[#allocation14 + $0x20] sm:$0xf]
    %v174 = vld [vmem:[#allocation14 + $0x24] sm:$0xf]
    %v175 = vld [vmem:[#allocation14 + $0x28] sm:$0xf]
    %v176 = vld [vmem:[#allocation14 + $0x2c] sm:$0xf]
    %v177 = vld [vmem:[#allocation14 + $0x30] sm:$0xf]
    %v178 = vld [vmem:[#allocation14 + $0x34] sm:$0xf]
    %v179 = vld [vmem:[#allocation14 + $0x38] sm:$0xf]
    %v180 = vld [vmem:[#allocation14 + $0x3c] sm:$0xf]
    %v181 = vld [vmem:[%s10] sm:$0x1]
    %v183 = vlaneseq
    %v184 = vshrl.u32 %v183, 7
    %v185 = vsub.s32 0, %v184
    %v186 = vrot.slane %v181, %v185
    %v204 = vunpack.c.l.b16 %v149
    %v205 = vunpack.c.l.b16 %v150
    %v206 = vunpack.c.l.b16 %v151
    %v207 = vunpack.c.l.b16 %v152
    %v208 = vunpack.c.l.b16 %v153
    %v209 = vunpack.c.l.b16 %v154
    %v210 = vunpack.c.l.b16 %v155
    %v211 = vunpack.c.l.b16 %v156
    %v212 = vunpack.c.l.b16 %v157
    %v213 = vunpack.c.l.b16 %v158
    %v214 = vunpack.c.l.b16 %v159
    %v215 = vunpack.c.l.b16 %v160
    %v216 = vunpack.c.l.b16 %v161
    %v217 = vunpack.c.l.b16 %v162
    %v218 = vunpack.c.l.b16 %v163
    %v219 = vunpack.c.l.b16 %v164
    %v220 = vpack.c.b16 %v205, %v204
    %v221 = vpack.c.b16 %v207, %v206
    %v222 = vpack.c.b16 %v209, %v208
    %v223 = vpack.c.b16 %v211, %v210
    %v224 = vpack.c.b16 %v213, %v212
    %v225 = vpack.c.b16 %v215, %v214
    %v226 = vpack.c.b16 %v217, %v216
    %v227 = vpack.c.b16 %v219, %v218
    %v252 = vunpack.c.l.b16 %v165
    %v253 = vunpack.c.l.b16 %v166
    %v254 = vunpack.c.l.b16 %v167
    %v255 = vunpack.c.l.b16 %v168
    %v256 = vunpack.c.l.b16 %v169
    %v257 = vunpack.c.l.b16 %v170
    %v258 = vunpack.c.l.b16 %v171
    %v259 = vunpack.c.l.b16 %v172
    %v260 = vunpack.c.l.b16 %v173
    %v261 = vunpack.c.l.b16 %v174
    %v262 = vunpack.c.l.b16 %v175
    %v263 = vunpack.c.l.b16 %v176
    %v264 = vunpack.c.l.b16 %v177
    %v265 = vunpack.c.l.b16 %v178
    %v266 = vunpack.c.l.b16 %v179
    %v267 = vunpack.c.l.b16 %v180
    %v268 = vpack.c.b16 %v253, %v252
    %v269 = vpack.c.b16 %v255, %v254
    %v270 = vpack.c.b16 %v257, %v256
    %v271 = vpack.c.b16 %v259, %v258
    %v272 = vpack.c.b16 %v261, %v260
    %v273 = vpack.c.b16 %v263, %v262
    %v274 = vpack.c.b16 %v265, %v264
    %v275 = vpack.c.b16 %v267, %v266
    %284 = vmatprep.subr.bf16.mxu0 0
    %285 = vmatpush1.bf16.msra.mxu0 %v268
    %286 = vmatprep.subr.bf16.mxu0 0
    %287 = vmatpush1.bf16.msra.mxu0 %v269
    %288 = vmatprep.subr.bf16.mxu0 0
    %289 = vmatpush1.bf16.msra.mxu0 %v270
    %290 = vmatprep.subr.bf16.mxu0 0
    %291 = vmatpush1.bf16.msra.mxu0 %v271
    %292 = vmatprep.subr.bf16.mxu0 0
    %293 = vmatpush1.bf16.msra.mxu0 %v272
    %294 = vmatprep.subr.bf16.mxu0 0
    %295 = vmatpush1.bf16.msra.mxu0 %v273
    %296 = vmatprep.subr.bf16.mxu0 0
    %297 = vmatpush1.bf16.msra.mxu0 %v274
    %298 = vmatprep.subr.bf16.mxu0 0
    %299 = vmatpush1.bf16.msra.mxu0 %v275
    %300 = vmatprep.subr.bf16.mxu0 0
    %301 = vmatpush1.bf16.msra.mxu0 0
    %302 = vmatprep.subr.bf16.mxu0 0
    %303 = vmatpush1.bf16.msra.mxu0 0
    %304 = vmatprep.subr.bf16.mxu0 0
    %305 = vmatpush1.bf16.msra.mxu0 0
    %306 = vmatprep.subr.bf16.mxu0 0
    %307 = vmatpush1.bf16.msra.mxu0 0
    %308 = vmatprep.subr.bf16.mxu0 0
    %309 = vmatpush1.bf16.msra.mxu0 0
    %310 = vmatprep.subr.bf16.mxu0 0
    %311 = vmatpush1.bf16.msra.mxu0 0
    %312 = vmatprep.subr.bf16.mxu0 0
    %313 = vmatpush1.bf16.msra.mxu0 0
    %314 = vmatprep.subr.bf16.mxu0 0
    %315 = vmatpush1.bf16.msra.mxu0 0
    %316 = vmatprep.mubr.bf16.mxu0 0
    %317 = vmatmul.mubr.bf16.gmra.mrb[0].mxu0 %v220
    %v318 = vpop.f32.mrb[0].mxu0
    %v319 = vadd.f32 %v186, %v318
    %v320 = vpop.f32.mrb[0].mxu0
    %v321 = vpop.f32.mrb[0].mxu0
    %v322 = vadd.f32 %v186, %v321
    %v323 = vpop.f32.mrb[0].mxu0
    %324 = vmatprep.mubr.bf16.mxu0 0
    %325 = vmatmul.mubr.bf16.gmra.mrb[0].mxu0 %v221
    %v326 = vpop.f32.mrb[0].mxu0
    %v327 = vadd.f32 %v186, %v326
    %v328 = vpop.f32.mrb[0].mxu0
    %v329 = vpop.f32.mrb[0].mxu0
    %v330 = vadd.f32 %v186, %v329
    %v331 = vpop.f32.mrb[0].mxu0
    %332 = vmatprep.mubr.bf16.mxu0 0
    %333 = vmatmul.mubr.bf16.gmra.mrb[0].mxu0 %v222
    %v334 = vpop.f32.mrb[0].mxu0
    %v335 = vadd.f32 %v186, %v334
    %v336 = vpop.f32.mrb[0].mxu0
    %v337 = vpop.f32.mrb[0].mxu0
    %v338 = vadd.f32 %v186, %v337
    %v339 = vpop.f32.mrb[0].mxu0
    %340 = vmatprep.mubr.bf16.mxu0 0
    %341 = vmatmul.mubr.bf16.gmra.mrb[0].mxu0 %v223
    %v342 = vpop.f32.mrb[0].mxu0
    %v343 = vadd.f32 %v186, %v342
    %v344 = vpop.f32.mrb[0].mxu0
    %v345 = vpop.f32.mrb[0].mxu0
    %v346 = vadd.f32 %v186, %v345
    %v347 = vpop.f32.mrb[0].mxu0
    %348 = vmatprep.mubr.bf16.mxu0 0
    %349 = vmatmul.mubr.bf16.gmra.mrb[0].mxu0 %v224
    %v350 = vpop.f32.mrb[0].mxu0
    %v351 = vadd.f32 %v186, %v350
    %v352 = vpop.f32.mrb[0].mxu0
    %v353 = vpop.f32.mrb[0].mxu0
    %v354 = vadd.f32 %v186, %v353
    %v355 = vpop.f32.mrb[0].mxu0
    %356 = vmatprep.mubr.bf16.mxu0 0
    %357 = vmatmul.mubr.bf16.gmra.mrb[0].mxu0 %v225
    %v358 = vpop.f32.mrb[0].mxu0
    %v359 = vadd.f32 %v186, %v358
    %v360 = vpop.f32.mrb[0].mxu0
    %v361 = vpop.f32.mrb[0].mxu0
    %v362 = vadd.f32 %v186, %v361
    %v363 = vpop.f32.mrb[0].mxu0
    %364 = vmatprep.mubr.bf16.mxu0 0
    %365 = vmatmul.mubr.bf16.gmra.mrb[0].mxu0 %v226
    %v366 = vpop.f32.mrb[0].mxu0
    %v367 = vadd.f32 %v186, %v366
    %v368 = vpop.f32.mrb[0].mxu0
    %v369 = vpop.f32.mrb[0].mxu0
    %v370 = vadd.f32 %v186, %v369
    %v371 = vpop.f32.mrb[0].mxu0
    %372 = vmatprep.mubr.bf16.mxu0 0
    %373 = vmatmul.mubr.bf16.gmra.mrb[0].mxu0 %v227
    %v374 = vpop.f32.mrb[0].mxu0
    %v375 = vadd.f32 %v186, %v374
    %v376 = vpop.f32.mrb[0].mxu0
    %v377 = vpop.f32.mrb[0].mxu0
    %v378 = vadd.f32 %v186, %v377
    %v379 = vpop.f32.mrb[0].mxu0
    %380 = vdwg.mxu0
    %381 = vst [vmem:[#allocation16] sm:$0xff] %v319
    %382 = vst [vmem:[#allocation16 + $0x8] sm:$0xff] %v322
    %383 = vst [vmem:[#allocation16 + $0x10] sm:$0xff] %v327
    %384 = vst [vmem:[#allocation16 + $0x18] sm:$0xff] %v330
    %385 = vst [vmem:[#allocation16 + $0x20] sm:$0xff] %v335
    %386 = vst [vmem:[#allocation16 + $0x28] sm:$0xff] %v338
    %387 = vst [vmem:[#allocation16 + $0x30] sm:$0xff] %v343
    %388 = vst [vmem:[#allocation16 + $0x38] sm:$0xff] %v346
    %389 = vst [vmem:[#allocation16 + $0x40] sm:$0xff] %v351
    %390 = vst [vmem:[#allocation16 + $0x48] sm:$0xff] %v354
    %391 = vst [vmem:[#allocation16 + $0x50] sm:$0xff] %v359
    %392 = vst [vmem:[#allocation16 + $0x58] sm:$0xff] %v362
    %393 = vst [vmem:[#allocation16 + $0x60] sm:$0xff] %v367
    %394 = vst [vmem:[#allocation16 + $0x68] sm:$0xff] %v370
    %395 = vst [vmem:[#allocation16 + $0x70] sm:$0xff] %v375
    %396 = vst [vmem:[#allocation16 + $0x78] sm:$0xff] %v378
    // Predicated region
    $region78: #{tpu_custom_call.1} parent=1 // pred_check
      _
    $region79: #{tpu_custom_call.1} parent=1 // pred_check_branch
      %398 = sbr.rel (0) target = $region81
    $region80: #{tpu_custom_call.1} parent=1 // pred_region
      %s400 = ssub.s32 2048, 2048
      %401 = vsyncadd [#allocation4], %s400
      %s402 = sshll.u32 [#allocation16], 4
      %s403 = int_to_ptr.vmem [resolvable:$true] %s402
      %408 = dma.vmem_to_hbm [thread:$0]  %s403, 2048, %s11, [#allocation4], 128, 128, 8
    $region81: #{tpu_custom_call.1} parent=1 // pred_fallthru
      _
    // Predicated region
    $region82: #{tpu_custom_call.1} parent=1 // pred_check
      _
    $region83: #{tpu_custom_call.1} parent=1 // pred_check_branch
      %410 = sbr.rel (0) target = $region85
    $region84: #{tpu_custom_call.1} parent=1 // pred_region
      %411 = dma.done [#allocation4], 2048
    $region85: #{tpu_custom_call.1} parent=1 // pred_fallthru
      _
    %412 = vsyncpa [#allocation3], 1
    %413 = vsyncpa [#allocation6], 1
    %414 = vsyncpa [#allocation9], 1
    %415 = vsyncpa [#allocation12], 1
    %416 = vsyncpa [#allocation15], 1
    %417 = vsyncpa [#allocation4], 1

</llo_original>
